<compile_context>
chip_gen: v6e
topology: v6e:2x2x1
jax: 0.10.0
libtpu: 0.0.40
codegen_flags: <defaults>
</compile_context>

<pallas_src>
import functools

import jax
import jax.numpy as jnp
from jax import lax
from jax.experimental import pallas as pl
from jax.experimental.pallas import tpu as pltpu


NEG_BIG = -1e30      # finite "-inf" for the running row max (avoids -inf - -inf NaN)
TINY = 1e-30         # guard for rows with no edges


def _round_up(n, m):
    return (n + m - 1) // m * m


def _pick_tile(n, cap):
    """Largest power-of-two tile <= cap that divides n (n is a multiple of 128)."""
    t = 128
    while t * 2 <= cap and n % (t * 2) == 0:
        t *= 2
    return t


# --------------------------------------------------------------- projection --
def _proj_kernel(x_ref, wt_ref, z_ref):
    z_ref[...] = jnp.dot(x_ref[...], wt_ref[...],
                         preferred_element_type=jnp.float32)


def _project(x_pad, wt_pad, tq):
    Np, Fp = x_pad.shape
    Hp = wt_pad.shape[1]
    return pl.pallas_call(
        _proj_kernel,
        out_shape=jax.ShapeDtypeStruct((Np, Hp), jnp.float32),
        grid_spec=pltpu.PrefetchScalarGridSpec(
            num_scalar_prefetch=0,
            grid=(Np // tq,),
            in_specs=[pl.BlockSpec((tq, Fp), lambda i: (i, 0)),
                      pl.BlockSpec((Fp, Hp), lambda i: (0, 0))],
            out_specs=pl.BlockSpec((tq, Hp), lambda i: (i, 0))),
        compiler_params=pltpu.CompilerParams(
            dimension_semantics=("parallel",),
            vmem_limit_bytes=32 * 1024 * 1024),
    )(x_pad, wt_pad)


# ---------------------------------------------------- tiled online attention --
def _gat_attn_kernel(a_ref, zq_ref, zk_ref, mask_ref,
                     out_ref, m_ref, l_ref,
                     s1_sc, m_sc, l_sc, acc_sc, *, slope):
    ki = pl.program_id(1)

    a = a_ref[...]                       # [2, Hp]
    a1 = a[0:1, :]                       # source half of `a`
    a2 = a[1:2, :]                       # dest half of `a`
    z_k = zk_ref[...]                    # [TK, Hp] f32

    @pl.when(ki == 0)
    def _init():
        # s1[i] = a1 . z_q[i] depends only on the q tile -> compute once per row
        # of the grid and keep it in VMEM scratch.
        s1_sc[...] = lax.dot_general(zq_ref[...], a1, (((1,), (1,)), ((), ())),
                                     preferred_element_type=jnp.float32)
        m_sc[...] = jnp.full_like(m_sc, NEG_BIG)
        l_sc[...] = jnp.zeros_like(l_sc)
        acc_sc[...] = jnp.zeros_like(acc_sc)

    # s2[j] = a2 . z_k[j] -> [1, TK] (MXU, lane-major result)
    s2 = lax.dot_general(a2, z_k, (((1,), (1,)), ((), ())),
                         preferred_element_type=jnp.float32)

    e = s1_sc[...] + s2                                # [TQ, TK]
    e = jnp.where(e > 0, e, slope * e)                 # LeakyReLU(0.05)
    # Fold the mask into the exponent: non-edges -> -inf -> exp -> 0.
    e = jnp.where(mask_ref[...] != 0, e, -jnp.inf)

    m_prev = m_sc[...]
    m_new = jnp.maximum(m_prev, jnp.max(e, axis=1, keepdims=True))
    corr = jnp.exp(m_prev - m_new)
    p = jnp.exp(e - m_new)                             # <= 1, overflow-safe

    l_sc[...] = corr * l_sc[...] + jnp.sum(p, axis=1, keepdims=True)
    acc_sc[...] = corr * acc_sc[...] + jnp.dot(
        p.astype(jnp.bfloat16), z_k.astype(jnp.bfloat16),
        preferred_element_type=jnp.float32)
    m_sc[...] = m_new

    @pl.when(ki == pl.num_programs(1) - 1)
    def _finalize():
        l_val = l_sc[...]
        inv = pl.reciprocal(jnp.maximum(l_val, TINY), approx=True)
        out_ref[...] = acc_sc[...] * inv
        m_ref[...] = m_sc[...]
        l_ref[...] = l_val


def gat_layer_pallas(x, adj_mask, fc_weight, a_weight, *, slope=0.05):
    """x: [N, F]; adj_mask: [N, N] 0/1; fc_weight: [H, F]; a_weight: [1, 2H]."""
    N, F = x.shape
    H = fc_weight.shape[0]
    f32 = jnp.float32

    # Pad everything to TPU-friendly (8, 128)-aligned shapes; lane dim of the
    # output is padded to 128 so stores are lane-dense (no masked vst).
    Np = _round_up(N, 128)
    Fp = _round_up(F, 128)
    Hp = _round_up(H, 128)
    TQ = _pick_tile(Np, 512)     # sized for v7x's 64 MiB VMEM budget
    TK = _pick_tile(Np, 2048)

    x_pad = jnp.zeros((Np, Fp), f32).at[:N, :F].set(x.astype(f32))
    wt_pad = jnp.zeros((Fp, Hp), f32).at[:F, :H].set(fc_weight.T.astype(f32))
    a_pad = jnp.zeros((2, Hp), f32)
    a_pad = a_pad.at[0, :H].set(a_weight[0, :H].astype(f32))
    a_pad = a_pad.at[1, :H].set(a_weight[0, H:].astype(f32))
    # int8 mask: 4x less HBM traffic than f32 for the largest streamed input.
    mask_i8 = jnp.zeros((Np, Np), jnp.int8).at[:N, :N].set(
        (adj_mask != 0).astype(jnp.int8))

    # ---- kernel 1: z = x @ W^T (computed once, not per attention tile) ------
    z_pad = _project(x_pad, wt_pad, TQ)

    # ---- kernel 2: tiled online-softmax attention ---------------------------
    kern = functools.partial(_gat_attn_kernel, slope=slope)
    out_pad, m, l = pl.pallas_call(
        kern,
        out_shape=(jax.ShapeDtypeStruct((Np, Hp), f32),
                   jax.ShapeDtypeStruct((Np, 1), f32),
                   jax.ShapeDtypeStruct((Np, 1), f32)),
        grid_spec=pltpu.PrefetchScalarGridSpec(
            num_scalar_prefetch=0,
            grid=(Np // TQ, Np // TK),
            in_specs=[
                pl.BlockSpec((2, Hp), lambda qi, ki: (0, 0)),    # a (both halves)
                pl.BlockSpec((TQ, Hp), lambda qi, ki: (qi, 0)),  # z rows (queries)
                pl.BlockSpec((TK, Hp), lambda qi, ki: (ki, 0)),  # z rows (keys)
                pl.BlockSpec((TQ, TK), lambda qi, ki: (qi, ki)), # adjacency tile
            ],
            out_specs=(
                pl.BlockSpec((TQ, Hp), lambda qi, ki: (qi, 0)),
                pl.BlockSpec((TQ, 1), lambda qi, ki: (qi, 0)),
                pl.BlockSpec((TQ, 1), lambda qi, ki: (qi, 0)),
            ),
            scratch_shapes=[pltpu.VMEM((TQ, 1), f32),    # s1 = a1·z_q (per q row)
                            pltpu.VMEM((TQ, 1), f32),    # running row max
                            pltpu.VMEM((TQ, 1), f32),    # running row sum
                            pltpu.VMEM((TQ, Hp), f32)]), # output accumulator
        compiler_params=pltpu.CompilerParams(
            dimension_semantics=("parallel", "arbitrary"),
            vmem_limit_bytes=32 * 1024 * 1024),
    )(a_pad, z_pad, z_pad, mask_i8)

    out = out_pad[:N, :H]
    z = z_pad[:N, :H]
    m = m[:N, 0]
    l = l[:N, 0]

    # ---- O(E) glue: edge-ordered alpha (row-major == torch coalesce order) --
    # alpha_e = exp(e_e - m[src]) / l[src]  ==  exp(e_e) / sum_j exp(e_{src,j}).
    # NOTE: jnp.nonzero is eager-only (data-dependent edge count), so this
    # wrapper cannot be jit-wrapped end to end.
    # TODO(synk): move this gather into a tiny Pallas kernel with
    # scalar-prefetched CSR offsets to make the full layer jit-able.
    rows, cols = jnp.nonzero(adj_mask)
    a1v = a_weight[0, :H].astype(f32)
    a2v = a_weight[0, H:].astype(f32)
    s1 = jnp.sum(z * a1v[None, :], axis=1)
    s2 = jnp.sum(z * a2v[None, :], axis=1)
    e = s1[rows] + s2[cols]
    e = jnp.where(e > 0, e, slope * e)
    alpha = jnp.exp(e - m[rows]) / jnp.maximum(l[rows], TINY)
    return out, alpha


if __name__ == "__main__":
    key = jax.random.PRNGKey(0)
    k_x, k_adj, k_w, k_a = jax.random.split(key, 4)

    N, n_feat, n_hidden = 16, 8, 32

    x = jax.random.normal(k_x, (N, n_feat), dtype=jnp.float32)

    # Random sparse adjacency + self-loops (every source node has >= 1 edge).
    adj_mask = (jax.random.uniform(k_adj, (N, N)) < 0.3).astype(jnp.float32)
    adj_mask = jnp.clip(adj_mask + jnp.eye(N, dtype=jnp.float32), 0.0, 1.0)

    # nn.Linear-shaped weights (bias=False): fc.weight [H, F], a.weight [1, 2H].
    fc_weight = jax.random.normal(k_w, (n_hidden, n_feat), dtype=jnp.float32) * 0.1
    a_weight = jax.random.normal(k_a, (1, 2 * n_hidden), dtype=jnp.float32) * 0.1

    out, alpha = gat_layer_pallas(x, adj_mask, fc_weight, a_weight)
    jax.block_until_ready((out, alpha))

    assert out.shape == (N, n_hidden)
    assert alpha.shape == (int(adj_mask.sum()),)
    assert bool(jnp.all(jnp.isfinite(out)))
    assert bool(jnp.all(jnp.isfinite(alpha)))

    # Sanity: per-source-node attention sums to 1.
    rows, _ = jnp.nonzero(adj_mask)
    row_sums = jnp.zeros((N,), jnp.float32).at[rows].add(alpha)
    assert bool(jnp.allclose(row_sums, 1.0, atol=1e-3)), row_sums

    # Dense float32 reference of the module's forward.
    hi = jax.lax.Precision.HIGHEST
    zr = jnp.dot(x, fc_weight.T, precision=hi)
    s1r = jnp.dot(zr, a_weight[0, :n_hidden], precision=hi)
    s2r = jnp.dot(zr, a_weight[0, n_hidden:], precision=hi)
    er = s1r[:, None] + s2r[None, :]
    er = jnp.where(er > 0, er, 0.05 * er)
    sc = jnp.exp(er) * adj_mask
    attr = sc / sc.sum(axis=1, keepdims=True)
    out_ref = jnp.dot(attr, zr, precision=hi)
    assert bool(jnp.allclose(out, out_ref, atol=1e-2, rtol=1e-2))

    print("KERNEL_OK")
</pallas_src>

<mosaic_0001>
module attributes {stable_mosaic.version = 11 : i64} {
  func.func @_proj_kernel(%arg0: i32, %arg1: memref<128x128xf32, #tpu.memory_space<vmem>>, %arg2: memref<128x128xf32, #tpu.memory_space<vmem>>, %arg3: memref<128x128xf32, #tpu.memory_space<vmem>>) attributes {dimension_semantics = [#tpu.dimension_semantics<parallel>], iteration_bounds = array<i64: 1>, scalar_prefetch = 0 : i64, scratch_operands = 0 : i64, tpu.core_type = #tpu.core_type<tc>, window_params = [{transform_indices = @transform_0, window_bounds = array<i64: 128, 128>}, {pipeline_mode = #tpu.pipeline_mode<synchronous>, transform_indices = @transform_1, window_bounds = array<i64: 128, 128>}, {transform_indices = @transform_2, window_bounds = array<i64: 128, 128>}]} {
    %c0 = arith.constant 0 : index
    %c0_0 = arith.constant 0 : index
    %0 = vector.load %arg1[%c0, %c0_0] : memref<128x128xf32, #tpu.memory_space<vmem>>, vector<128x128xf32>
    %c0_1 = arith.constant 0 : index
    %c0_2 = arith.constant 0 : index
    %1 = vector.load %arg2[%c0_1, %c0_2] : memref<128x128xf32, #tpu.memory_space<vmem>>, vector<128x128xf32>
    %cst = arith.constant dense<0.000000e+00> : vector<128x128xf32>
    %2 = tpu.matmul %0, %1, %cst {dimension_numbers = #tpu.dot_dimension_numbers<[1], [0], [0], [1], [0, 0, 1, 1], [], []>} : vector<128x128xf32>, vector<128x128xf32>, vector<128x128xf32> -> vector<128x128xf32>
    %c0_3 = arith.constant 0 : index
    %c0_4 = arith.constant 0 : index
    %3 = vector.load %arg3[%c0_3, %c0_4] : memref<128x128xf32, #tpu.memory_space<vmem>>, vector<128x128xf32>
    tpu.vector_store %arg3[%c0_3, %c0_4], %2 {strides = array<i32>} : memref<128x128xf32, #tpu.memory_space<vmem>>, vector<128x128xf32>,
    return
  }
  func.func @transform_0(%arg0: i32) -> (i32, i32) {
    %c0_i32 = arith.constant 0 : i32
    %c0_i32_0 = arith.constant 0 : i32
    return %arg0, %c0_i32 : i32, i32
  }
  func.func @transform_1(%arg0: i32) -> (i32, i32) {
    %c0_i32 = arith.constant 0 : i32
    %c0_i32_0 = arith.constant 0 : i32
    %c0_i32_1 = arith.constant 0 : i32
    return %c0_i32, %c0_i32_0 : i32, i32
  }
  func.func @transform_2(%arg0: i32) -> (i32, i32) {
    %c0_i32 = arith.constant 0 : i32
    %c0_i32_0 = arith.constant 0 : i32
    return %arg0, %c0_i32 : i32, i32
  }
}

</mosaic_0001>

<llo_original>
// kernel: tpu_custom_call.1
$region0: #{tpu_custom_call.1}
  #allocation0 [shape = 'u32[]', space=smem, size = 0x4, offset = 0x4, fixed_abs, tag = 'smem constant byte address 0x4 - core index']
  #allocation1 [shape = 'u32[144,128]{1,0:T(1,128)}', space=vmem, size = 0x12000, scoped, tag = 'internal scratch']
  %s0 = inlined_call_operand.hbm [shape: f32[128,128], index: 0, kind: input, shape index: {}]
  %s1 = inlined_call_operand.hbm [shape: f32[128,128], index: 1, kind: input, shape index: {}]
  %s2 = inlined_call_operand.hbm [shape: f32[128,128], index: 2, kind: output, shape index: {}]
  %s3 = sld [smem:[#allocation0]]
  $region26: #{tpu_custom_call.1} parent=0
    _
  %s5 = ssub.s32 1, %s3
  %s6 = scalar_select 0, %s5, %s3
  $region1: #{tpu_custom_call.1} parent=0
    #allocation2 [shape = 'u8[65536]{0}', space=vmem, size = 0x10000, scoped, tag = 'input window, operand 0, single buffered']
    #allocation3 [shape = 's32[1]{0}', space=sflag, size = 0x4, scoped, tag = 'scoped memory for tpu_custom_call.1']
    #allocation4 [shape = 's32[1]{0}', space=sflag, size = 0x4, scoped, tag = 'scoped memory for tpu_custom_call.1']
    #allocation5 [shape = 'u8[65536]{0}', space=vmem, size = 0x10000, scoped, tag = 'input window, operand 1, single buffered']
    #allocation6 [shape = 's32[1]{0}', space=sflag, size = 0x4, scoped, tag = 'scoped memory for tpu_custom_call.1']
    #allocation7 [shape = 'u8[65536]{0}', space=vmem, size = 0x10000, scoped, tag = 'output window, operand 0, single buffered']
    %7 = vsyncpa [#allocation3], 0
    %8 = vsyncpa [#allocation6], 0
    %9 = vsyncpa [#allocation4], 0
    // Predicated region
    $region2: #{tpu_custom_call.1} parent=1 // pred_check
      _
    $region3: #{tpu_custom_call.1} parent=1 // pred_check_branch
      %11 = sbr.rel (0) target = $region5
    $region4: #{tpu_custom_call.1} parent=1 // pred_region
      %s13 = ssub.s32 2048, 2048
      %14 = vsyncadd [#allocation3], %s13
      %s15 = sshll.u32 [#allocation2], 4
      %s16 = int_to_ptr.vmem [resolvable:$true] %s15
      %21 = dma.hbm_to_vmem [thread:$0]  %s0, 2048, %s16, [#allocation3], 128, 128, 8
    $region5: #{tpu_custom_call.1} parent=1 // pred_fallthru
      _
    // Predicated region
    $region6: #{tpu_custom_call.1} parent=1 // pred_check
      _
    $region7: #{tpu_custom_call.1} parent=1 // pred_check_branch
      %23 = sbr.rel (0) target = $region9
    $region8: #{tpu_custom_call.1} parent=1 // pred_region
      %s25 = ssub.s32 2048, 2048
      %26 = vsyncadd [#allocation6], %s25
      %s27 = sshll.u32 [#allocation5], 4
      %s28 = int_to_ptr.vmem [resolvable:$true] %s27
      %33 = dma.hbm_to_vmem [thread:$0]  %s1, 2048, %s28, [#allocation6], 128, 128, 8
    $region9: #{tpu_custom_call.1} parent=1 // pred_fallthru
      _
    // Predicated region
    $region10: #{tpu_custom_call.1} parent=1 // pred_check
      _
    $region11: #{tpu_custom_call.1} parent=1 // pred_check_branch
      %35 = sbr.rel (0) target = $region13
    $region12: #{tpu_custom_call.1} parent=1 // pred_region
      %36 = dma.done [#allocation3], 2048
    $region13: #{tpu_custom_call.1} parent=1 // pred_fallthru
      _
    // Predicated region
    $region14: #{tpu_custom_call.1} parent=1 // pred_check
      _
    $region15: #{tpu_custom_call.1} parent=1 // pred_check_branch
      %38 = sbr.rel (0) target = $region17
    $region16: #{tpu_custom_call.1} parent=1 // pred_region
      %39 = dma.done [#allocation6], 2048
    $region17: #{tpu_custom_call.1} parent=1 // pred_fallthru
      _
    %v40 = vld [vmem:[#allocation2] sm:$0xff]
    %v41 = vld [vmem:[#allocation2 + $0x8] sm:$0xff]
    %v42 = vld [vmem:[#allocation2 + $0x10] sm:$0xff]
    %v43 = vld [vmem:[#allocation2 + $0x18] sm:$0xff]
    %v44 = vld [vmem:[#allocation2 + $0x20] sm:$0xff]
    %v45 = vld [vmem:[#allocation2 + $0x28] sm:$0xff]
    %v46 = vld [vmem:[#allocation2 + $0x30] sm:$0xff]
    %v47 = vld [vmem:[#allocation2 + $0x38] sm:$0xff]
    %v48 = vld [vmem:[#allocation2 + $0x40] sm:$0xff]
    %v49 = vld [vmem:[#allocation2 + $0x48] sm:$0xff]
    %v50 = vld [vmem:[#allocation2 + $0x50] sm:$0xff]
    %v51 = vld [vmem:[#allocation2 + $0x58] sm:$0xff]
    %v52 = vld [vmem:[#allocation2 + $0x60] sm:$0xff]
    %v53 = vld [vmem:[#allocation2 + $0x68] sm:$0xff]
    %v54 = vld [vmem:[#allocation2 + $0x70] sm:$0xff]
    %v55 = vld [vmem:[#allocation2 + $0x78] sm:$0xff]
    %v56 = vld [vmem:[#allocation5] sm:$0xff]
    %v57 = vld [vmem:[#allocation5 + $0x8] sm:$0xff]
    %v58 = vld [vmem:[#allocation5 + $0x10] sm:$0xff]
    %v59 = vld [vmem:[#allocation5 + $0x18] sm:$0xff]
    %v60 = vld [vmem:[#allocation5 + $0x20] sm:$0xff]
    %v61 = vld [vmem:[#allocation5 + $0x28] sm:$0xff]
    %v62 = vld [vmem:[#allocation5 + $0x30] sm:$0xff]
    %v63 = vld [vmem:[#allocation5 + $0x38] sm:$0xff]
    %v64 = vld [vmem:[#allocation5 + $0x40] sm:$0xff]
    %v65 = vld [vmem:[#allocation5 + $0x48] sm:$0xff]
    %v66 = vld [vmem:[#allocation5 + $0x50] sm:$0xff]
    %v67 = vld [vmem:[#allocation5 + $0x58] sm:$0xff]
    %v68 = vld [vmem:[#allocation5 + $0x60] sm:$0xff]
    %v69 = vld [vmem:[#allocation5 + $0x68] sm:$0xff]
    %v70 = vld [vmem:[#allocation5 + $0x70] sm:$0xff]
    %v71 = vld [vmem:[#allocation5 + $0x78] sm:$0xff]
    %72 = vmatprep.subr.mxu0 0.0
    %73 = vmatpush1.msra.mxu0 %v71
    %74 = vmatprep.subr.mxu0 0.0
    %75 = vmatpush1.msra.mxu0 %v70
    %76 = vmatprep.subr.mxu0 0.0
    %77 = vmatpush1.msra.mxu0 %v69
    %78 = vmatprep.subr.mxu0 0.0
    %79 = vmatpush1.msra.mxu0 %v68
    %80 = vmatprep.subr.mxu0 0.0
    %81 = vmatpush1.msra.mxu0 %v67
    %82 = vmatprep.subr.mxu0 0.0
    %83 = vmatpush1.msra.mxu0 %v66
    %84 = vmatprep.subr.mxu0 0.0
    %85 = vmatpush1.msra.mxu0 %v65
    %86 = vmatprep.subr.mxu0 0.0
    %87 = vmatpush1.msra.mxu0 %v64
    %88 = vmatprep.subr.mxu0 0.0
    %89 = vmatpush1.msra.mxu0 %v63
    %90 = vmatprep.subr.mxu0 0.0
    %91 = vmatpush1.msra.mxu0 %v62
    %92 = vmatprep.subr.mxu0 0.0
    %93 = vmatpush1.msra.mxu0 %v61
    %94 = vmatprep.subr.mxu0 0.0
    %95 = vmatpush1.msra.mxu0 %v60
    %96 = vmatprep.subr.mxu0 0.0
    %97 = vmatpush1.msra.mxu0 %v59
    %98 = vmatprep.subr.mxu0 0.0
    %99 = vmatpush1.msra.mxu0 %v58
    %100 = vmatprep.subr.mxu0 0.0
    %101 = vmatpush1.msra.mxu0 %v57
    %102 = vmatprep.subr.mxu0 0.0
    %103 = vmatpush1.msra.mxu0 %v56
    %104 = vmatprep.subr.mxu0 0.0
    %105 = vmatpush2.msra.mxu0 0.0
    %106 = vmatprep.subr.mxu0 0.0
    %107 = vmatpush2.msra.mxu0 0.0
    %108 = vmatprep.subr.mxu0 0.0
    %109 = vmatpush2.msra.mxu0 0.0
    %110 = vmatprep.subr.mxu0 0.0
    %111 = vmatpush2.msra.mxu0 0.0
    %112 = vmatprep.subr.mxu0 0.0
    %113 = vmatpush2.msra.mxu0 0.0
    %114 = vmatprep.subr.mxu0 0.0
    %115 = vmatpush2.msra.mxu0 0.0
    %116 = vmatprep.subr.mxu0 0.0
    %117 = vmatpush2.msra.mxu0 0.0
    %118 = vmatprep.subr.mxu0 0.0
    %119 = vmatpush2.msra.mxu0 0.0
    %120 = vmatprep.subr.mxu0 0.0
    %121 = vmatpush2.msra.mxu0 0.0
    %122 = vmatprep.subr.mxu0 0.0
    %123 = vmatpush2.msra.mxu0 0.0
    %124 = vmatprep.subr.mxu0 0.0
    %125 = vmatpush2.msra.mxu0 0.0
    %126 = vmatprep.subr.mxu0 0.0
    %127 = vmatpush2.msra.mxu0 0.0
    %128 = vmatprep.subr.mxu0 0.0
    %129 = vmatpush2.msra.mxu0 0.0
    %130 = vmatprep.subr.mxu0 0.0
    %131 = vmatpush2.msra.mxu0 0.0
    %132 = vmatprep.subr.mxu0 0.0
    %133 = vmatpush2.msra.mxu0 0.0
    %134 = vmatprep.subr.mxu0 0.0
    %135 = vmatpush2.msra.mxu0 0.0
    %136 = vmatprep.mubr.f32.mxu0 0.0
    %137 = vmatmul.mubr.f32.gmra.mxu0 %v40
    %v138 = vpop.f32.mrf.mxu0
    %v139 = vadd.f32 0.0, %v138
    %v140 = vpop.f32.mrf.mxu0
    %141 = vmatprep.mubr.f32.mxu0 0.0
    %142 = vmatmul.mubr.f32.gmra.mxu0 %v41
    %v143 = vpop.f32.mrf.mxu0
    %v144 = vadd.f32 0.0, %v143
    %v145 = vpop.f32.mrf.mxu0
    %146 = vmatprep.mubr.f32.mxu0 0.0
    %147 = vmatmul.mubr.f32.gmra.mxu0 %v42
    %v148 = vpop.f32.mrf.mxu0
    %v149 = vadd.f32 0.0, %v148
    %v150 = vpop.f32.mrf.mxu0
    %151 = vmatprep.mubr.f32.mxu0 0.0
    %152 = vmatmul.mubr.f32.gmra.mxu0 %v43
    %v153 = vpop.f32.mrf.mxu0
    %v154 = vadd.f32 0.0, %v153
    %v155 = vpop.f32.mrf.mxu0
    %156 = vmatprep.mubr.f32.mxu0 0.0
    %157 = vmatmul.mubr.f32.gmra.mxu0 %v44
    %v158 = vpop.f32.mrf.mxu0
    %v159 = vadd.f32 0.0, %v158
    %v160 = vpop.f32.mrf.mxu0
    %161 = vmatprep.mubr.f32.mxu0 0.0
    %162 = vmatmul.mubr.f32.gmra.mxu0 %v45
    %v163 = vpop.f32.mrf.mxu0
    %v164 = vadd.f32 0.0, %v163
    %v165 = vpop.f32.mrf.mxu0
    %166 = vmatprep.mubr.f32.mxu0 0.0
    %167 = vmatmul.mubr.f32.gmra.mxu0 %v46
    %v168 = vpop.f32.mrf.mxu0
    %v169 = vadd.f32 0.0, %v168
    %v170 = vpop.f32.mrf.mxu0
    %171 = vmatprep.mubr.f32.mxu0 0.0
    %172 = vmatmul.mubr.f32.gmra.mxu0 %v47
    %v173 = vpop.f32.mrf.mxu0
    %v174 = vadd.f32 0.0, %v173
    %v175 = vpop.f32.mrf.mxu0
    %176 = vmatprep.mubr.f32.mxu0 0.0
    %177 = vmatmul.mubr.f32.gmra.mxu0 %v48
    %v178 = vpop.f32.mrf.mxu0
    %v179 = vadd.f32 0.0, %v178
    %v180 = vpop.f32.mrf.mxu0
    %181 = vmatprep.mubr.f32.mxu0 0.0
    %182 = vmatmul.mubr.f32.gmra.mxu0 %v49
    %v183 = vpop.f32.mrf.mxu0
    %v184 = vadd.f32 0.0, %v183
    %v185 = vpop.f32.mrf.mxu0
    %186 = vmatprep.mubr.f32.mxu0 0.0
    %187 = vmatmul.mubr.f32.gmra.mxu0 %v50
    %v188 = vpop.f32.mrf.mxu0
    %v189 = vadd.f32 0.0, %v188
    %v190 = vpop.f32.mrf.mxu0
    %191 = vmatprep.mubr.f32.mxu0 0.0
    %192 = vmatmul.mubr.f32.gmra.mxu0 %v51
    %v193 = vpop.f32.mrf.mxu0
    %v194 = vadd.f32 0.0, %v193
    %v195 = vpop.f32.mrf.mxu0
    %196 = vmatprep.mubr.f32.mxu0 0.0
    %197 = vmatmul.mubr.f32.gmra.mxu0 %v52
    %v198 = vpop.f32.mrf.mxu0
    %v199 = vadd.f32 0.0, %v198
    %v200 = vpop.f32.mrf.mxu0
    %201 = vmatprep.mubr.f32.mxu0 0.0
    %202 = vmatmul.mubr.f32.gmra.mxu0 %v53
    %v203 = vpop.f32.mrf.mxu0
    %v204 = vadd.f32 0.0, %v203
    %v205 = vpop.f32.mrf.mxu0
    %206 = vmatprep.mubr.f32.mxu0 0.0
    %207 = vmatmul.mubr.f32.gmra.mxu0 %v54
    %v208 = vpop.f32.mrf.mxu0
    %v209 = vadd.f32 0.0, %v208
    %v210 = vpop.f32.mrf.mxu0
    %211 = vmatprep.mubr.f32.mxu0 0.0
    %212 = vmatmul.mubr.f32.gmra.mxu0 %v55
    %v213 = vpop.f32.mrf.mxu0
    %v214 = vadd.f32 0.0, %v213
    %v215 = vpop.f32.mrf.mxu0
    %216 = vdwg.mxu0
    %217 = vst [vmem:[#allocation7] sm:$0xff] %v139
    %218 = vst [vmem:[#allocation7 + $0x8] sm:$0xff] %v144
    %219 = vst [vmem:[#allocation7 + $0x10] sm:$0xff] %v149
    %220 = vst [vmem:[#allocation7 + $0x18] sm:$0xff] %v154
    %221 = vst [vmem:[#allocation7 + $0x20] sm:$0xff] %v159
    %222 = vst [vmem:[#allocation7 + $0x28] sm:$0xff] %v164
    %223 = vst [vmem:[#allocation7 + $0x30] sm:$0xff] %v169
    %224 = vst [vmem:[#allocation7 + $0x38] sm:$0xff] %v174
    %225 = vst [vmem:[#allocation7 + $0x40] sm:$0xff] %v179
    %226 = vst [vmem:[#allocation7 + $0x48] sm:$0xff] %v184
    %227 = vst [vmem:[#allocation7 + $0x50] sm:$0xff] %v189
    %228 = vst [vmem:[#allocation7 + $0x58] sm:$0xff] %v194
    %229 = vst [vmem:[#allocation7 + $0x60] sm:$0xff] %v199
    %230 = vst [vmem:[#allocation7 + $0x68] sm:$0xff] %v204
    %231 = vst [vmem:[#allocation7 + $0x70] sm:$0xff] %v209
    %232 = vst [vmem:[#allocation7 + $0x78] sm:$0xff] %v214
    // Predicated region
    $region18: #{tpu_custom_call.1} parent=1 // pred_check
      _
    $region19: #{tpu_custom_call.1} parent=1 // pred_check_branch
      %234 = sbr.rel (0) target = $region21
    $region20: #{tpu_custom_call.1} parent=1 // pred_region
      %s236 = ssub.s32 2048, 2048
      %237 = vsyncadd [#allocation4], %s236
      %s238 = sshll.u32 [#allocation7], 4
      %s239 = int_to_ptr.vmem [resolvable:$true] %s238
      %244 = dma.vmem_to_hbm [thread:$0]  %s239, 2048, %s2, [#allocation4], 128, 128, 8
    $region21: #{tpu_custom_call.1} parent=1 // pred_fallthru
      _
    // Predicated region
    $region22: #{tpu_custom_call.1} parent=1 // pred_check
      _
    $region23: #{tpu_custom_call.1} parent=1 // pred_check_branch
      %246 = sbr.rel (0) target = $region25
    $region24: #{tpu_custom_call.1} parent=1 // pred_region
      %247 = dma.done [#allocation4], 2048
    $region25: #{tpu_custom_call.1} parent=1 // pred_fallthru
      _
    %248 = vsyncpa [#allocation3], 1
    %249 = vsyncpa [#allocation6], 1
    %250 = vsyncpa [#allocation4], 1

</llo_original>
